<compile_context>
chip_gen: v7x
topology: tpu7x:2x2x1
jax: 0.10.0
libtpu: 0.0.40
codegen_flags: <defaults>
</compile_context>

<pallas_src>
import functools

import jax
import jax.numpy as jnp
from jax import lax
from jax.experimental import pallas as pl
from jax.experimental.pallas import tpu as pltpu

_LANES = 128
_SUBLANES = 8
_GROUP_ROWS = 64                        # row-group size at width 128 (scaled by width)
_DEFAULT_BLOCK_BYTES = 4 * 1024 * 1024  # (pr block + gt block) HBM bytes per grid step
_MAX_BLOCK_ROWS = 32768
_MAX_WIDTH = 2048                       # widest lane dim synthesized from trailing dims

_OK_PR_DTYPES = (jnp.float32, jnp.bfloat16, jnp.float16)
_OK_GT_DTYPES = (jnp.int8, jnp.uint8, jnp.int32, jnp.uint32,
                 jnp.float32, jnp.bfloat16, jnp.float16)


def _make_count_kernel(rows, width, block_rows, blocks_per_split, group_rows,
                       gt_is_float, need_mask):
    """Kernel: accumulate per-lane counts of correct predictions into acc_ref."""

    def kernel(pr_ref, gt_ref, acc_ref):
        @pl.when(pl.program_id(1) == 0)
        def _init():
            acc_ref[...] = jnp.zeros_like(acc_ref)

        # Logical (UNclamped) block index.  For "phantom" steps past the last real
        # block (and for rows beyond the array in the ragged last block) the row
        # mask below is all-False, so they contribute exactly 0.
        blk = pl.program_id(0) * blocks_per_split + pl.program_id(1)
        row0 = blk * block_rows

        def fold(row_off, nrows):
            p = pr_ref[pl.ds(row_off, nrows), :]
            t = gt_ref[pl.ds(row_off, nrows), :]
            pred = p >= 0.5
            tgt = (t >= 0.5) if gt_is_float else (t != 0)
            ok = pred == tgt
            if need_mask:
                rid = lax.broadcasted_iota(jnp.int32, (nrows, width), 0)
                ok = jnp.logical_and(ok, (row0 + row_off + rid) < rows)
            # Sublane-direction reduce (XLU slot is free in this HBM-bound kernel).
            return jnp.sum(ok.astype(jnp.int32), axis=0, keepdims=True)  # (1, width)

        acc = jnp.zeros((1, width), jnp.int32)
        n_groups = block_rows // group_rows
        rem = block_rows - n_groups * group_rows
        if n_groups:
            def body(g, carry):
                off = pl.multiple_of(g * group_rows, group_rows)
                return carry + fold(off, group_rows)
            acc = lax.fori_loop(0, n_groups, body, acc)
        if rem:
            acc = acc + fold(n_groups * group_rows, rem)

        acc_ref[...] += acc[None]

    return kernel


def _pallas_correct_count(pr2, gt2, block_bytes):
    """Count elements where (pr2 >= 0.5) == binarize(gt2) over a 2-D (rows, width) view."""
    rows, width = pr2.shape
    width_pad = -(-width // _LANES) * _LANES          # lanes actually occupied in VMEM
    row_bytes = width_pad * (pr2.dtype.itemsize + gt2.dtype.itemsize)

    target_rows = min(_MAX_BLOCK_ROWS, max(_SUBLANES, int(block_bytes) // row_bytes))
    if rows <= target_rows:
        block_rows = rows                              # single block == full row extent
    else:
        block_rows = (target_rows // _SUBLANES) * _SUBLANES

    nb = -(-rows // block_rows)                        # number of real blocks
    splits = 1 if nb == 1 else 2                       # v7x megacore split (no-op elsewhere)
    bps = -(-nb // splits)
    need_mask = (splits * bps * block_rows) != rows    # ragged tail and/or phantom step
    gt_is_float = jnp.issubdtype(gt2.dtype, jnp.floating)
    group_rows = max(_SUBLANES, (_GROUP_ROWS * _LANES) // width_pad)

    kernel = _make_count_kernel(rows, width, block_rows, bps, group_rows,
                                gt_is_float, need_mask)

    def in_idx(c, i):
        # Clamp so the DMA of a phantom step re-reads the last real block (its
        # contribution is masked to zero in the kernel) instead of going OOB.
        return (jnp.minimum(c * bps + i, nb - 1), 0)

    acc = pl.pallas_call(
        kernel,
        out_shape=jax.ShapeDtypeStruct((splits, 1, width), jnp.int32),
        grid_spec=pltpu.PrefetchScalarGridSpec(
            num_scalar_prefetch=0,
            grid=(splits, bps),
            in_specs=[pl.BlockSpec((block_rows, width), in_idx),
                      pl.BlockSpec((block_rows, width), in_idx)],
            out_specs=pl.BlockSpec((1, 1, width), lambda c, i: (c, 0, 0)),
        ),
        compiler_params=pltpu.CompilerParams(
            dimension_semantics=("parallel", "arbitrary"),
            vmem_limit_bytes=32 * 1024 * 1024),
    )(pr2, gt2)

    return jnp.sum(acc)                                # tiny (splits, 1, width) int32


@functools.partial(jax.jit, static_argnames=("block_bytes",))
def arrowfcn_acc_metric(pr, gt, block_bytes=_DEFAULT_BLOCK_BYTES):
    """torchmetrics.Accuracy() over binary masks: mean((pr >= 0.5) == binarize(gt))."""
    if pr.size != gt.size:
        raise ValueError(f"pr/gt element counts differ: {pr.size} vs {gt.size}")
    n = pr.size
    if n == 0:
        return jnp.float32(0.0)

    # --- dtype normalization: keep streams as narrow as possible ---------------------
    pr_n = pr if pr.dtype in _OK_PR_DTYPES else pr.astype(jnp.float32)
    if gt.dtype == jnp.bool_:
        gt_n = gt.astype(jnp.int8)          # 1 B/elem instead of 4 B/elem
    elif gt.dtype in _OK_GT_DTYPES:
        gt_n = gt
    else:
        gt_n = gt.astype(jnp.int32)         # e.g. int16 / exotic dtypes

    # --- choose a copy-free 2-D (rows, width) view ------------------------------------
    if n % _LANES == 0:
        width = _LANES                                      # lane-perfect flat view
    else:
        width = 1
        for d in reversed(pr.shape):                        # merge trailing dims
            if width * d > _MAX_WIDTH:
                break
            width *= d

    extra = 0
    if n % _LANES == 0 or width >= _SUBLANES:
        pr2 = pr_n.reshape(-1, width)                       # free (bitcast) reshapes
        gt2 = gt_n.reshape(-1, width)
    else:
        # TODO(synk): rare awkward shapes (large 1-D, prime-ish sizes): padded fallback;
        # this is the only path that pays an extra O(n) copy before the kernel.
        pad = (-n) % (_SUBLANES * _LANES)
        pr2 = jnp.pad(pr_n.reshape(-1), (0, pad)).reshape(-1, _LANES)
        gt2 = jnp.pad(gt_n.reshape(-1), (0, pad)).reshape(-1, _LANES)
        extra = pad      # padded elems (pred=0, gt=0) are counted correct; remove below

    correct = _pallas_correct_count(pr2, gt2, block_bytes) - extra
    return correct.astype(jnp.float32) / jnp.float32(n)


class ArrowFCNAccMetric:
    """Thin forward-only stand-in for the PyTorch module (per-batch accuracy)."""

    def __call__(self, pr, gt):
        return arrowfcn_acc_metric(pr, gt)

    forward = __call__


def _reference_accuracy(pr, gt):
    """Pure-JAX reference (same semantics) for validation."""
    pred = pr.reshape(-1) >= 0.5
    g = gt.reshape(-1)
    tgt = (g >= 0.5) if jnp.issubdtype(g.dtype, jnp.floating) else (g != 0)
    return jnp.mean((pred == tgt).astype(jnp.float32))


if __name__ == "__main__":
    key = jax.random.PRNGKey(0)
    keys = jax.random.split(key, 4)

    # (shape, pr_dtype, gt_dtype, block_bytes)  -- small budgets force multi-block grids
    tests = [
        ((2, 16, 16),   jnp.float32,  jnp.uint8, _DEFAULT_BLOCK_BYTES),  # tiny, lane-aligned
        ((3, 200, 200), jnp.float32,  jnp.int32, _DEFAULT_BLOCK_BYTES),  # n%128!=0 -> width=200 view
        ((3, 200, 200), jnp.float32,  jnp.uint8, 160 * 1024),            # ragged tail + phantom step
        ((4, 64, 128),  jnp.bfloat16, jnp.bool_, 40 * 1024),             # flat view, bf16 pr, bool gt
    ]
    for idx, (shape, pr_dt, gt_dt, bb) in enumerate(tests):
        kp, kg = jax.random.split(keys[idx], 2)
        pr = jax.random.uniform(kp, shape, dtype=jnp.float32).astype(pr_dt)
        gt_bool = jax.random.uniform(kg, shape) > 0.5
        gt = gt_bool if gt_dt == jnp.bool_ else gt_bool.astype(gt_dt)

        acc = jax.block_until_ready(arrowfcn_acc_metric(pr, gt, block_bytes=bb))
        ref = _reference_accuracy(pr, gt)
        assert jnp.allclose(acc, ref, atol=1e-6), (shape, float(acc), float(ref))

    print("KERNEL_OK")
</pallas_src>

<mosaic_0001>
module attributes {stable_mosaic.version = 11 : i64} {
  func.func @kernel(%arg0: i32, %arg1: i32, %arg2: memref<4x128xf32, #tpu.memory_space<vmem>>, %arg3: memref<4x128xi8, #tpu.memory_space<vmem>>, %arg4: memref<1x1x128xi32, #tpu.memory_space<vmem>>) attributes {dimension_semantics = [#tpu.dimension_semantics<parallel>, #tpu.dimension_semantics<arbitrary>], iteration_bounds = array<i64: 1, 1>, scalar_prefetch = 0 : i64, scratch_operands = 0 : i64, tpu.core_type = #tpu.core_type<tc>, window_params = [{transform_indices = @transform_0, window_bounds = array<i64: 4, 128>}, {transform_indices = @transform_1, window_bounds = array<i64: 4, 128>}, {transform_indices = @transform_2, window_bounds = array<i64: 1, 1, 128>}]} {
    %c0_i32 = arith.constant 0 : i32
    %0 = arith.cmpi eq, %arg1, %c0_i32 : i32
    %1 = arith.extui %0 : i1 to i32
    %c0_i32_0 = arith.constant 0 : i32
    %2 = arith.cmpi ne, %1, %c0_i32_0 : i32
    scf.if %2 {
      %c0_i32_13 = arith.constant 0 : i32
      %20 = vector.broadcast %c0_i32_13 : i32 to vector<1x1x128xi32>
      %c0_14 = arith.constant 0 : index
      %c0_15 = arith.constant 0 : index
      %c0_16 = arith.constant 0 : index
      %21 = vector.load %arg4[%c0_14, %c0_15, %c0_16] : memref<1x1x128xi32, #tpu.memory_space<vmem>>, vector<1x1x128xi32>
      tpu.vector_store %arg4[%c0_14, %c0_15, %c0_16], %20 {strides = array<i32>} : memref<1x1x128xi32, #tpu.memory_space<vmem>>, vector<1x1x128xi32>,
    } else {
    }
    %c0_i32_1 = arith.constant 0 : i32
    %3 = vector.broadcast %c0_i32_1 : i32 to vector<1x128xi32>
    %c0 = arith.constant 0 : index
    %c0_2 = arith.constant 0 : index
    %4 = vector.load %arg2[%c0, %c0_2] : memref<4x128xf32, #tpu.memory_space<vmem>>, vector<4x128xf32>
    %c0_3 = arith.constant 0 : index
    %c0_4 = arith.constant 0 : index
    %5 = vector.load %arg3[%c0_3, %c0_4] : memref<4x128xi8, #tpu.memory_space<vmem>>, vector<4x128xi8>
    %cst = arith.constant 5.000000e-01 : f32
    %6 = vector.broadcast %cst : f32 to vector<4x128xf32>
    %7 = arith.cmpf oge, %4, %6 : vector<4x128xf32>
    %c0_i8 = arith.constant 0 : i8
    %8 = vector.broadcast %c0_i8 : i8 to vector<4x128xi8>
    %9 = arith.cmpi ne, %5, %8 : vector<4x128xi8>
    %10 = arith.xori %7, %9 : vector<4x128xi1>
    %cst_5 = arith.constant dense<true> : vector<4x128xi1>
    %11 = arith.xori %10, %cst_5 : vector<4x128xi1>
    %12 = arith.extui %11 : vector<4x128xi1> to vector<4x128xi32>
    %cst_6 = arith.constant dense<0> : vector<128xi32>
    %13 = vector.multi_reduction <add>, %12, %cst_6 [0] : vector<4x128xi32> to vector<128xi32>
    %14 = vector.shape_cast %13 : vector<128xi32> to vector<1x128xi32>
    %15 = arith.addi %3, %14 : vector<1x128xi32>
    %c0_7 = arith.constant 0 : index
    %c0_8 = arith.constant 0 : index
    %c0_9 = arith.constant 0 : index
    %16 = vector.load %arg4[%c0_7, %c0_8, %c0_9] : memref<1x1x128xi32, #tpu.memory_space<vmem>>, vector<1x1x128xi32>
    %17 = vector.shape_cast %15 : vector<1x128xi32> to vector<1x1x128xi32>
    %18 = arith.addi %16, %17 : vector<1x1x128xi32>
    %c0_10 = arith.constant 0 : index
    %c0_11 = arith.constant 0 : index
    %c0_12 = arith.constant 0 : index
    %19 = vector.load %arg4[%c0_10, %c0_11, %c0_12] : memref<1x1x128xi32, #tpu.memory_space<vmem>>, vector<1x1x128xi32>
    tpu.vector_store %arg4[%c0_10, %c0_11, %c0_12], %18 {strides = array<i32>} : memref<1x1x128xi32, #tpu.memory_space<vmem>>, vector<1x1x128xi32>,
    return
  }
  func.func @transform_0(%arg0: i32, %arg1: i32) -> (i32, i32) {
    %c1_i32 = arith.constant 1 : i32
    %0 = arith.muli %arg0, %c1_i32 : i32
    %1 = arith.addi %0, %arg1 : i32
    %c0_i32 = arith.constant 0 : i32
    %2 = arith.minsi %1, %c0_i32 : i32
    %c0_i32_0 = arith.constant 0 : i32
    %c0_i32_1 = arith.constant 0 : i32
    return %2, %c0_i32_0 : i32, i32
  }
  func.func @transform_1(%arg0: i32, %arg1: i32) -> (i32, i32) {
    %c1_i32 = arith.constant 1 : i32
    %0 = arith.muli %arg0, %c1_i32 : i32
    %1 = arith.addi %0, %arg1 : i32
    %c0_i32 = arith.constant 0 : i32
    %2 = arith.minsi %1, %c0_i32 : i32
    %c0_i32_0 = arith.constant 0 : i32
    %c0_i32_1 = arith.constant 0 : i32
    return %2, %c0_i32_0 : i32, i32
  }
  func.func @transform_2(%arg0: i32, %arg1: i32) -> (i32, i32, i32) {
    %c0_i32 = arith.constant 0 : i32
    %c0_i32_0 = arith.constant 0 : i32
    %c0_i32_1 = arith.constant 0 : i32
    return %arg0, %c0_i32, %c0_i32_0 : i32, i32, i32
  }
}

</mosaic_0001>

<llo_original>
// kernel: arrowfcn_acc_metric.1
$region0: #{arrowfcn_acc_metric.1}
  #allocation0 [shape = 'u32[]', space=smem, size = 0x4, offset = 0x4, fixed_abs, tag = 'smem constant byte address 0x4 - core index']
  #allocation1 [shape = 'u32[144,128]{1,0:T(1,128)}', space=vmem, size = 0x12000, scoped, tag = 'internal scratch']
  %s0 = inlined_call_operand.vmem [shape: f32[4,128], index: 0, kind: input, shape index: {}]
  %s1 = inlined_call_operand.vmem [shape: u8[4,128], index: 1, kind: input, shape index: {}]
  %s2 = inlined_call_operand.vmem [shape: s32[1,1,128], index: 2, kind: output, shape index: {}]
  %s3 = sld [smem:[#allocation0]]
  $region22: #{arrowfcn_acc_metric.1} parent=0
    _
  %s5 = ssub.s32 1, %s3
  %s6 = scalar_select 0, %s5, %s3
  // Predicated region
  $region2: #{arrowfcn_acc_metric.1} parent=0 // pred_check
    _
  $region3: #{arrowfcn_acc_metric.1} parent=0 // pred_check_branch
    %8 = sbr.rel (0) target = $region5
  $region4: #{arrowfcn_acc_metric.1} parent=0 // pred_region
    %s9 = sadd.s32 0, 0
    %p10 = scmp.lt.s32.totalorder %s9, 0
    %s11 = scalar_select %p10, %s9, 0
    %p12 = scmp.lt.s32.totalorder %s11, 0
    %s13 = scalar_select %p12, %s11, 0
    %s14 = smul.addr %s13, 4
    %s15 = scalar_lea.vmem %s0, %s14
    %s16 = sadd.s32 0, 0
    %p17 = scmp.lt.s32.totalorder %s16, 0
    %s18 = scalar_select %p17, %s16, 0
  $region5: #{arrowfcn_acc_metric.1} parent=0 // pred_fallthru
    _
  // Predicated region
  $region6: #{arrowfcn_acc_metric.1} parent=0 // pred_check
    _
  $region7: #{arrowfcn_acc_metric.1} parent=0 // pred_check_branch
    %20 = sbr.rel (0) target = $region9
  $region8: #{arrowfcn_acc_metric.1} parent=0 // pred_region
    %s21 = sadd.s32 0, 0
    %p22 = scmp.lt.s32.totalorder %s21, 0
    %s23 = scalar_select %p22, %s21, 0
    %p24 = scmp.lt.s32.totalorder %s23, 0
    %s25 = scalar_select %p24, %s23, 0
    %s26 = scalar_lea.vmem %s1, %s25
    %s27 = sadd.s32 0, 0
    %p28 = scmp.lt.s32.totalorder %s27, 0
    %s29 = scalar_select %p28, %s27, 0
  $region9: #{arrowfcn_acc_metric.1} parent=0 // pred_fallthru
    _
  %s30 = sadd.s32 0, 0
  %p31 = scmp.lt.s32.totalorder %s30, 0
  %s32 = scalar_select %p31, %s30, 0
  %p33 = scmp.lt.s32.totalorder %s32, 0
  %s34 = scalar_select %p33, %s32, 0
  %s35 = smul.addr %s34, 4
  %s36 = scalar_lea.vmem %s0, %s35
  %s37 = sadd.s32 0, 0
  %p38 = scmp.lt.s32.totalorder %s37, 0
  %s39 = scalar_select %p38, %s37, 0
  %p40 = scmp.lt.s32.totalorder %s39, 0
  %s41 = scalar_select %p40, %s39, 0
  %s42 = scalar_lea.vmem %s1, %s41
  %s43 = sadd.s32 0, 0
  %p44 = scmp.lt.s32.totalorder %s43, 0
  %s45 = scalar_select %p44, %s43, 0
  %p46 = scmp.lt.s32.totalorder %s45, 0
  %s47 = scalar_select %p46, %s45, 0
  %s48 = smul.addr %s47, 4
  %s49 = scalar_lea.vmem %s0, %s48
  %s50 = sadd.s32 0, 0
  %p51 = scmp.lt.s32.totalorder %s50, 0
  %s52 = scalar_select %p51, %s50, 0
  %s53 = sadd.s32 0, 0
  %p54 = scmp.lt.s32.totalorder %s53, 0
  %s55 = scalar_select %p54, %s53, 0
  %p56 = scmp.lt.s32.totalorder %s55, 0
  %s57 = scalar_select %p56, %s55, 0
  %s58 = scalar_lea.vmem %s1, %s57
  %s59 = sadd.s32 0, 0
  %p60 = scmp.lt.s32.totalorder %s59, 0
  %s61 = scalar_select %p60, %s59, 0
  %p64 = scmp.eq.s32.totalorder 0, 0
  // Predicated region
  $region10: #{arrowfcn_acc_metric.1} parent=0 // pred_check
    %p65 = pneg %p64
  $region11: #{arrowfcn_acc_metric.1} parent=0 // pred_check_branch
    %67 = sbr.rel (%p65) target = $region13
  $region12: #{arrowfcn_acc_metric.1} parent=0 // pred_region
    %68 = vst [vmem:[%s2] sm:$0x1] 0
  $region13: #{arrowfcn_acc_metric.1} parent=0 // pred_fallthru
    _
  %v69 = vld [vmem:[%s49] sm:$0xf]
  %v70 = vld [vmem:[%s58] sm:$0x1]
  %vm71 = vcmp.ge.f32.partialorder %v69, 0.5
  %vm72 = vnez %v70
  %v73 = vsel %vm72, 16843009, 0
  %v74 = vunpack.c.0.s8 %v73
  %vm75 = vcmp.ne.s32.totalorder %v74, 0
  %vm76 = vmxor %vm71, %vm75
  %vm77 = vmxor %vm76, 1
  %v78 = vsel %vm77, 1, 0
  %vm79 = vcmask 1043456
  %v80 = vsel %vm79, %v78, 0
  %v81 = vrot.slane %v80, 4
  %v82 = vadd.s32 %v80, %v81
  %v83 = vrot.slane %v82, 2
  %v84 = vadd.s32 %v82, %v83
  %v85 = vrot.slane %v84, 1
  %v86 = vadd.s32 %v84, %v85
  %v87 = vld [vmem:[%s2] sm:$0x1]
  %v88 = vadd.s32 %v87, %v86
  %89 = vst [vmem:[%s2] sm:$0x1] %v88
  // Predicated region
  $region14: #{arrowfcn_acc_metric.1} parent=0 // pred_check
    _
  $region15: #{arrowfcn_acc_metric.1} parent=0 // pred_check_branch
    %91 = sbr.rel (0) target = $region17
  $region16: #{arrowfcn_acc_metric.1} parent=0 // pred_region
    _
  $region17: #{arrowfcn_acc_metric.1} parent=0 // pred_fallthru
    _
  // Predicated region
  $region18: #{arrowfcn_acc_metric.1} parent=0 // pred_check
    _
  $region19: #{arrowfcn_acc_metric.1} parent=0 // pred_check_branch
    %93 = sbr.rel (0) target = $region21
  $region20: #{arrowfcn_acc_metric.1} parent=0 // pred_region
    _
  $region21: #{arrowfcn_acc_metric.1} parent=0 // pred_fallthru
    _

</llo_original>
